<compile_context>
chip_gen: v7x
topology: tpu7x:2x2x1
jax: 0.10.0
libtpu: 0.0.40
codegen_flags: <defaults>
</compile_context>

<pallas_src>
import jax
import jax.numpy as jnp
from jax.experimental import pallas as pl
from jax.experimental.pallas import tpu as pltpu


def _round_up(x, m):
    return ((x + m - 1) // m) * m


def line_loss(nodes_embed, context_nodes_embed, source_node, target_node, label,
              order, *, tile_pairs=None, num_cores=2):
    """Pallas equivalent of Line.forward(source_node, target_node, label)."""
    assert order in (1, 2), "order has to be 1 or 2"
    n_pairs = int(source_node.shape[0])
    assert n_pairs > 0, "need at least one (source, target) pair"
    n1, dim = nodes_embed.shape
    table = nodes_embed if order == 1 else context_nodes_embed

    # ---- wrapper-side gather: dense, pipelinable inputs for the kernel -------
    src = nodes_embed[source_node].astype(jnp.float32)      # (n_pairs, dim)
    tgt = table[target_node].astype(jnp.float32)            # (n_pairs, dim)

    # ---- lane-dense last dim: pad dim to a multiple of 128 with zeros --------
    dim_p = _round_up(dim, 128)
    if dim_p != dim:
        src = jnp.pad(src, ((0, 0), (0, dim_p - dim)))
        tgt = jnp.pad(tgt, ((0, 0), (0, dim_p - dim)))

    # ---- tiling: TP pairs per grid step, multiple of 8 -----------------------
    if tile_pairs is None:
        per_core = _round_up(pl.cdiv(n_pairs, num_cores), 8)
        # keep each double-buffered input tile at <= ~4 MiB of VMEM
        vmem_rows = max(8, ((4 * 1024 * 1024) // (dim_p * 4)) // 8 * 8)
        tile_pairs = max(8, min(512, per_core, vmem_rows))
    TP = int(tile_pairs)
    assert TP % 8 == 0
    n_tiles = _round_up(pl.cdiv(n_pairs, TP), num_cores)
    tiles_per_core = n_tiles // num_cores
    n_pad = n_tiles * TP
    pad_rows = n_pad - n_pairs
    if pad_rows:
        src = jnp.pad(src, ((0, pad_rows), (0, 0)))
        tgt = jnp.pad(tgt, ((0, pad_rows), (0, 0)))
    lab = jnp.pad(label.astype(jnp.float32), (0, pad_rows),
                  constant_values=1.0).reshape(n_pad, 1)

    inv_n = 1.0 / float(n_pairs)

    def kernel(s_ref, t_ref, lab_ref, out_ref, acc_ref):
        c = pl.program_id(0)
        t = pl.program_id(1)

        @pl.when(t == 0)
        def _init():
            acc_ref[...] = jnp.zeros_like(acc_ref)

        s = s_ref[...]                                        # (TP, dim_p)
        tt = t_ref[...]                                       # (TP, dim_p)
        ip = jnp.sum(s * tt, axis=-1, keepdims=True)          # (TP, 1) inner prod
        x = lab_ref[...] * ip                                 # label * <s, t>
        # numerically stable logsigmoid(x) = min(x, 0) - log1p(exp(-|x|))
        ls = jnp.minimum(x, 0.0) - jnp.log1p(jnp.exp(-jnp.abs(x)))
        # mask padded rows: global row index >= n_pairs contributes 0
        row0 = (c * tiles_per_core + t) * TP
        rows = row0 + jax.lax.broadcasted_iota(jnp.int32, (TP, 1), 0)
        acc_ref[...] += jnp.where(rows < n_pairs, ls, 0.0)

        @pl.when(t == pl.num_programs(1) - 1)
        def _finalize():
            partial = jnp.sum(acc_ref[...]) * (-inv_n)        # this core's share
            out_ref[...] = jnp.full(out_ref.shape, partial, jnp.float32)

    def row_map(c, t):
        return (c * tiles_per_core + t, 0)

    out = pl.pallas_call(
        kernel,
        out_shape=jax.ShapeDtypeStruct((num_cores, 8, 128), jnp.float32),
        grid_spec=pltpu.PrefetchScalarGridSpec(
            num_scalar_prefetch=0,
            grid=(num_cores, tiles_per_core),
            in_specs=[
                pl.BlockSpec((TP, dim_p), row_map),           # source rows
                pl.BlockSpec((TP, dim_p), row_map),           # target rows
                pl.BlockSpec((TP, 1), row_map),               # labels
            ],
            out_specs=pl.BlockSpec((1, 8, 128), lambda c, t: (c, 0, 0)),
            scratch_shapes=[pltpu.VMEM((TP, 1), jnp.float32)],
        ),
        compiler_params=pltpu.CompilerParams(
            dimension_semantics=("parallel", "arbitrary"),
        ),
    )(src, tgt, lab)

    # sum the per-core partials (each already scaled by -1/n_pairs)
    return jnp.sum(out[:, 0, 0])


def line_loss_ref(nodes_embed, context_nodes_embed, source_node, target_node, label, order):
    """Pure-JAX reference mirroring the PyTorch forward."""
    src = nodes_embed[source_node]
    tgt = (nodes_embed if order == 1 else context_nodes_embed)[target_node]
    inner_product = jnp.sum(src * tgt, axis=1)
    return -jnp.mean(jax.nn.log_sigmoid(label * inner_product))


if __name__ == "__main__":
    key = jax.random.PRNGKey(0)
    k_nodes, k_ctx, k_src, k_tgt = jax.random.split(key, 4)

    # small, deterministic problem: n1 nodes, dim-dim embeddings, order-2 LINE
    n1, dim, order = 64, 32, 2
    num_source, num_neg = 8, 4
    n_pairs = num_source * (num_neg + 1)   # 40

    nodes_embed = jax.random.uniform(k_nodes, (n1, dim), jnp.float32, -1.0, 1.0)
    context_nodes_embed = jax.random.uniform(k_ctx, (n1, dim), jnp.float32, -1.0, 1.0)

    # inputs: each source node repeated (1 + K) times; labels [1, -1, ..., -1]
    src_base = jax.random.randint(k_src, (num_source,), 0, n1, jnp.int32)
    source_node = jnp.repeat(src_base, num_neg + 1)                         # (40,)
    target_node = jax.random.randint(k_tgt, (n_pairs,), 0, n1, jnp.int32)   # (40,)
    label = jnp.tile(
        jnp.concatenate(
            [jnp.ones((1,), jnp.float32), -jnp.ones((num_neg,), jnp.float32)]
        ),
        num_source,
    )                                                                       # (40,)

    loss = line_loss(nodes_embed, context_nodes_embed,
                     source_node, target_node, label, order)
    loss = jax.block_until_ready(loss)

    ref = line_loss_ref(nodes_embed, context_nodes_embed,
                        source_node, target_node, label, order)
    assert jnp.allclose(loss, ref, atol=1e-5, rtol=1e-5), (loss, ref)
    print("KERNEL_OK")
</pallas_src>

<mosaic_0001>
module attributes {stable_mosaic.version = 11 : i64} {
  func.func @kernel(%arg0: i32, %arg1: i32, %arg2: memref<24x128xf32, #tpu.memory_space<vmem>>, %arg3: memref<24x128xf32, #tpu.memory_space<vmem>>, %arg4: memref<24x1xf32, #tpu.memory_space<vmem>>, %arg5: memref<1x8x128xf32, #tpu.memory_space<vmem>>, %arg6: memref<24x1xf32, #tpu.memory_space<vmem>>) attributes {dimension_semantics = [#tpu.dimension_semantics<parallel>, #tpu.dimension_semantics<arbitrary>], iteration_bounds = array<i64: 2, 1>, scalar_prefetch = 0 : i64, scratch_operands = 1 : i64, tpu.core_type = #tpu.core_type<tc>, window_params = [{transform_indices = @transform_0, window_bounds = array<i64: 24, 128>}, {transform_indices = @transform_1, window_bounds = array<i64: 24, 128>}, {transform_indices = @transform_2, window_bounds = array<i64: 24, 1>}, {transform_indices = @transform_3, window_bounds = array<i64: 1, 8, 128>}]} {
    %c0_i32 = arith.constant 0 : i32
    %0 = arith.cmpi eq, %arg1, %c0_i32 : i32
    %1 = arith.extui %0 : i1 to i32
    %c0_i32_0 = arith.constant 0 : i32
    %2 = arith.cmpi ne, %1, %c0_i32_0 : i32
    scf.if %2 {
      %cst_15 = arith.constant 0.000000e+00 : f32
      %34 = vector.broadcast %cst_15 : f32 to vector<24x1xf32>
      %c0_16 = arith.constant 0 : index
      %c0_17 = arith.constant 0 : index
      %35 = vector.load %arg6[%c0_16, %c0_17] : memref<24x1xf32, #tpu.memory_space<vmem>>, vector<24x1xf32>
      tpu.vector_store %arg6[%c0_16, %c0_17], %34 {strides = array<i32>} : memref<24x1xf32, #tpu.memory_space<vmem>>, vector<24x1xf32>,
    } else {
    }
    %c0 = arith.constant 0 : index
    %c0_1 = arith.constant 0 : index
    %3 = vector.load %arg2[%c0, %c0_1] : memref<24x128xf32, #tpu.memory_space<vmem>>, vector<24x128xf32>
    %c0_2 = arith.constant 0 : index
    %c0_3 = arith.constant 0 : index
    %4 = vector.load %arg3[%c0_2, %c0_3] : memref<24x128xf32, #tpu.memory_space<vmem>>, vector<24x128xf32>
    %5 = arith.mulf %3, %4 : vector<24x128xf32>
    %cst = arith.constant dense<0.000000e+00> : vector<24xf32>
    %6 = vector.multi_reduction <add>, %5, %cst [1] : vector<24x128xf32> to vector<24xf32>
    %7 = vector.shape_cast %6 : vector<24xf32> to vector<24x1xf32>
    %c0_4 = arith.constant 0 : index
    %c0_5 = arith.constant 0 : index
    %8 = vector.load %arg4[%c0_4, %c0_5] : memref<24x1xf32, #tpu.memory_space<vmem>>, vector<24x1xf32>
    %9 = arith.mulf %8, %7 : vector<24x1xf32>
    %cst_6 = arith.constant 0.000000e+00 : f32
    %10 = vector.broadcast %cst_6 : f32 to vector<24x1xf32>
    %11 = arith.minimumf %9, %10 : vector<24x1xf32>
    %12 = math.absf %9 : vector<24x1xf32>
    %cst_7 = arith.constant 0.000000e+00 : f32
    %13 = vector.broadcast %cst_7 : f32 to vector<24x1xf32>
    %14 = arith.subf %13, %12 : vector<24x1xf32>
    %15 = math.exp %14 : vector<24x1xf32>
    %16 = math.log1p %15 : vector<24x1xf32>
    %17 = arith.subf %11, %16 : vector<24x1xf32>
    %c1_i32 = arith.constant 1 : i32
    %18 = arith.muli %arg0, %c1_i32 : i32
    %19 = arith.addi %18, %arg1 : i32
    %c24_i32 = arith.constant 24 : i32
    %20 = arith.muli %19, %c24_i32 : i32
    %21 = tpu.iota {dimensions = array<i32: 0>} : vector<24x1xi32>
    %22 = vector.broadcast %20 : i32 to vector<24x1xi32>
    %23 = arith.addi %22, %21 : vector<24x1xi32>
    %c0_8 = arith.constant 0 : index
    %c0_9 = arith.constant 0 : index
    %24 = vector.load %arg6[%c0_8, %c0_9] : memref<24x1xf32, #tpu.memory_space<vmem>>, vector<24x1xf32>
    %c40_i32 = arith.constant 40 : i32
    %25 = vector.broadcast %c40_i32 : i32 to vector<24x1xi32>
    %26 = arith.cmpi slt, %23, %25 : vector<24x1xi32>
    %cst_10 = arith.constant 0.000000e+00 : f32
    %27 = vector.broadcast %cst_10 : f32 to vector<24x1xf32>
    %28 = arith.select %26, %17, %27 : vector<24x1xi1>, vector<24x1xf32>
    %29 = arith.addf %24, %28 : vector<24x1xf32>
    %c0_11 = arith.constant 0 : index
    %c0_12 = arith.constant 0 : index
    %30 = vector.load %arg6[%c0_11, %c0_12] : memref<24x1xf32, #tpu.memory_space<vmem>>, vector<24x1xf32>
    tpu.vector_store %arg6[%c0_11, %c0_12], %29 {strides = array<i32>} : memref<24x1xf32, #tpu.memory_space<vmem>>, vector<24x1xf32>,
    %c0_i32_13 = arith.constant 0 : i32
    %31 = arith.cmpi eq, %arg1, %c0_i32_13 : i32
    %32 = arith.extui %31 : i1 to i32
    %c0_i32_14 = arith.constant 0 : i32
    %33 = arith.cmpi ne, %32, %c0_i32_14 : i32
    scf.if %33 {
      %c0_15 = arith.constant 0 : index
      %c0_16 = arith.constant 0 : index
      %34 = vector.load %arg6[%c0_15, %c0_16] : memref<24x1xf32, #tpu.memory_space<vmem>>, vector<24x1xf32>
      %35 = vector.shape_cast %34 : vector<24x1xf32> to vector<1x24x1xf32>
      %cst_17 = arith.constant dense<0.000000e+00> : vector<1xf32>
      %36 = vector.multi_reduction <add>, %35, %cst_17 [1, 2] : vector<1x24x1xf32> to vector<1xf32>
      %37 = vector.shape_cast %36 : vector<1xf32> to vector<1x1x1xf32>
      %38 = vector.extract %37[0, 0, 0] : f32 from vector<1x1x1xf32>
      %cst_18 = arith.constant -2.500000e-02 : f32
      %39 = arith.mulf %38, %cst_18 : f32
      %40 = vector.broadcast %39 : f32 to vector<1x8x128xf32>
      %c0_19 = arith.constant 0 : index
      %c0_20 = arith.constant 0 : index
      %c0_21 = arith.constant 0 : index
      %41 = vector.load %arg5[%c0_19, %c0_20, %c0_21] : memref<1x8x128xf32, #tpu.memory_space<vmem>>, vector<1x8x128xf32>
      tpu.vector_store %arg5[%c0_19, %c0_20, %c0_21], %40 {strides = array<i32>} : memref<1x8x128xf32, #tpu.memory_space<vmem>>, vector<1x8x128xf32>,
    } else {
    }
    return
  }
  func.func @transform_0(%arg0: i32, %arg1: i32) -> (i32, i32) {
    %c1_i32 = arith.constant 1 : i32
    %0 = arith.muli %arg0, %c1_i32 : i32
    %1 = arith.addi %0, %arg1 : i32
    %c0_i32 = arith.constant 0 : i32
    %c0_i32_0 = arith.constant 0 : i32
    return %1, %c0_i32 : i32, i32
  }
  func.func @transform_1(%arg0: i32, %arg1: i32) -> (i32, i32) {
    %c1_i32 = arith.constant 1 : i32
    %0 = arith.muli %arg0, %c1_i32 : i32
    %1 = arith.addi %0, %arg1 : i32
    %c0_i32 = arith.constant 0 : i32
    %c0_i32_0 = arith.constant 0 : i32
    return %1, %c0_i32 : i32, i32
  }
  func.func @transform_2(%arg0: i32, %arg1: i32) -> (i32, i32) {
    %c1_i32 = arith.constant 1 : i32
    %0 = arith.muli %arg0, %c1_i32 : i32
    %1 = arith.addi %0, %arg1 : i32
    %c0_i32 = arith.constant 0 : i32
    %c0_i32_0 = arith.constant 0 : i32
    return %1, %c0_i32 : i32, i32
  }
  func.func @transform_3(%arg0: i32, %arg1: i32) -> (i32, i32, i32) {
    %c0_i32 = arith.constant 0 : i32
    %c0_i32_0 = arith.constant 0 : i32
    %c0_i32_1 = arith.constant 0 : i32
    return %arg0, %c0_i32, %c0_i32_0 : i32, i32, i32
  }
}

</mosaic_0001>

<llo_original>
// kernel: tpu_custom_call.1
$region0: #{tpu_custom_call.1}
  #allocation0 [shape = 'u32[]', space=smem, size = 0x4, offset = 0x4, fixed_abs, tag = 'smem constant byte address 0x4 - core index']
  #allocation1 [shape = 'u32[144,128]{1,0:T(1,128)}', space=vmem, size = 0x12000, scoped, tag = 'internal scratch']
  #allocation2 [shape = 'f32[24,1]{1,0:T(8,128)}', space=vmem, size = 0x3000, scoped, tag = 'scratch operand']
  %s0 = inlined_call_operand.vmem [shape: f32[48,128], index: 0, kind: input, shape index: {}]
  %s1 = inlined_call_operand.hbm [shape: f32[48,128], index: 1, kind: input, shape index: {}]
  %s2 = inlined_call_operand.vmem [shape: f32[48,1], index: 2, kind: input, shape index: {}]
  %s3 = inlined_call_operand.hbm [shape: f32[2,8,128], index: 3, kind: output, shape index: {}]
  %s4 = sld [smem:[#allocation0]]
  $region57: #{tpu_custom_call.1} parent=0
    _
  %s6 = ssub.s32 1, %s4
  %s7 = scalar_select 0, %s6, %s4
  $region1: #{tpu_custom_call.1} parent=0
    #allocation3 [shape = 'u8[24576]{0}', space=vmem, size = 0x6000, scoped, tag = 'input window, operand 1']
    #allocation4 [shape = 's32[2]{0}', space=sflag, size = 0x8, scoped, tag = 'scoped memory for tpu_custom_call.1']
    #allocation5 [shape = 's32[2]{0}', space=sflag, size = 0x8, scoped, tag = 'scoped memory for tpu_custom_call.1']
    #allocation6 [shape = 'u8[8192]{0}', space=vmem, size = 0x2000, scoped, tag = 'output window, operand 0']
    %8 = vsyncpa [#allocation4], 0
    %s9 = scalar_lea.sflag [#allocation4], 1
    %10 = vsyncpa %s9, 0
    %11 = vsyncpa [#allocation5], 0
    %s12 = scalar_lea.sflag [#allocation5], 1
    %13 = vsyncpa %s12, 0
    loop: start=0, step=1, limit=4
    $region2: #{tpu_custom_call.1} parent=1 // loop_pre_header
      _
    $region3: #{tpu_custom_call.1} parent=1 // loop_header
      %s15 = sphi 0, %s19
      %p16 = scmp.ge.s32.totalorder %s15, 4
      %s22 = sphi 0, %s34
      %s23 = sphi 0, %s30
      %s24 = sphi 0, %s22
      %s25 = sphi 0, %s23
      %s26 = sphi 0, %s24
      %s27 = sphi 0, %s25
      %s39 = sphi 0, %s41
      %s42 = sphi 0, %s39
      %s43 = sphi 0, %s42
      %s59 = sphi 0, %s43
      %s67 = sphi 0, %s69
      %s70 = sphi 0, %s67
      %s71 = sphi 0, %s70
      %s87 = sphi 0, %s71
      %s95 = sphi 0, %s97
      %s98 = sphi 0, %s95
      %s99 = sphi 0, %s98
      %s115 = sphi 0, %s99
      %s121 = sphi 0, %s123
      %s124 = sphi 0, %s121
      %s125 = sphi 0, %s124
      %s141 = sphi 0, %s125
    $region4: #{tpu_custom_call.1} parent=1 // loop_header_branch
      %18 = sbr.rel (%p16) target = $region8
    $region5: #{tpu_custom_call.1} parent=1 // loop_body
      %s20 = ssub.s32 %s15, 1
      %s21 = ssub.s32 %s15, 2
      %s28 = sadd.s32 1, %s23
      %p29 = scmp.ge.s32.totalorder %s28, 1
      %s30 = scalar_select %p29, 0, %s28
      %s31 = sadd.s32 1, %s22
      %s32 = scalar_select %p29, %s31, %s22
      %p33 = scmp.ge.s32.totalorder %s32, 2
      %s34 = scalar_select %p33, 0, %s32
      %s35 = sadd.s32 %s22, %s23
      %s36 = sadd.s32 %s34, %s30
      %s37 = ssub.s32 %s35, %s36
      %p38 = scmp.eq.s32.totalorder %s37, 0
      %s40 = sadd.s32 %s39, 1
      %s41 = scalar_select %p38, %s39, %s40
      %p44 = pneg %p38
      %p45 = scmp.eq.s32.totalorder %s15, 1
      %p46 = por %p44, %p45
      %p47 = scmp.ne.s32.totalorder %s39, %s42
      %p48 = scmp.eq.s32.totalorder %s15, 0
      %p49 = por %p47, %p48
      %p50 = scmp.ne.s32.totalorder %s39, %s42
      %p51 = scmp.eq.s32.totalorder %s20, 1
      %p52 = por %p50, %p51
      %p53 = scmp.ne.s32.totalorder %s42, %s43
      %p54 = scmp.eq.s32.totalorder %s20, 0
      %p55 = por %p53, %p54
      %p56 = scmp.ne.s32.totalorder %s42, %s43
      %p57 = scmp.eq.s32.totalorder %s21, 1
      %p58 = por %p56, %p57
      %p60 = scmp.ne.s32.totalorder %s43, %s59
      %p61 = scmp.eq.s32.totalorder %s21, 0
      %p62 = por %p60, %p61
      %s63 = sadd.s32 %s22, %s23
      %s64 = sadd.s32 %s34, %s30
      %s65 = ssub.s32 %s63, %s64
      %p66 = scmp.eq.s32.totalorder %s65, 0
      %s68 = sadd.s32 %s67, 1
      %s69 = scalar_select %p66, %s67, %s68
      %p72 = pneg %p66
      %p73 = scmp.eq.s32.totalorder %s15, 1
      %p74 = por %p72, %p73
      %p75 = scmp.ne.s32.totalorder %s67, %s70
      %p76 = scmp.eq.s32.totalorder %s15, 0
      %p77 = por %p75, %p76
      %p78 = scmp.ne.s32.totalorder %s67, %s70
      %p79 = scmp.eq.s32.totalorder %s20, 1
      %p80 = por %p78, %p79
      %p81 = scmp.ne.s32.totalorder %s70, %s71
      %p82 = scmp.eq.s32.totalorder %s20, 0
      %p83 = por %p81, %p82
      %p84 = scmp.ne.s32.totalorder %s70, %s71
      %p85 = scmp.eq.s32.totalorder %s21, 1
      %p86 = por %p84, %p85
      %p88 = scmp.ne.s32.totalorder %s71, %s87
      %p89 = scmp.eq.s32.totalorder %s21, 0
      %p90 = por %p88, %p89
      %s91 = sadd.s32 %s22, %s23
      %s92 = sadd.s32 %s34, %s30
      %s93 = ssub.s32 %s91, %s92
      %p94 = scmp.eq.s32.totalorder %s93, 0
      %s96 = sadd.s32 %s95, 1
      %s97 = scalar_select %p94, %s95, %s96
      %p100 = pneg %p94
      %p101 = scmp.eq.s32.totalorder %s15, 1
      %p102 = por %p100, %p101
      %p103 = scmp.ne.s32.totalorder %s95, %s98
      %p104 = scmp.eq.s32.totalorder %s15, 0
      %p105 = por %p103, %p104
      %p106 = scmp.ne.s32.totalorder %s95, %s98
      %p107 = scmp.eq.s32.totalorder %s20, 1
      %p108 = por %p106, %p107
      %p109 = scmp.ne.s32.totalorder %s98, %s99
      %p110 = scmp.eq.s32.totalorder %s20, 0
      %p111 = por %p109, %p110
      %p112 = scmp.ne.s32.totalorder %s98, %s99
      %p113 = scmp.eq.s32.totalorder %s21, 1
      %p114 = por %p112, %p113
      %p116 = scmp.ne.s32.totalorder %s99, %s115
      %p117 = scmp.eq.s32.totalorder %s21, 0
      %p118 = por %p116, %p117
      %s119 = ssub.s32 %s22, %s34
      %p120 = scmp.eq.s32.totalorder %s119, 0
      %s122 = sadd.s32 %s121, 1
      %s123 = scalar_select %p120, %s121, %s122
      %p126 = pneg %p120
      %p127 = scmp.eq.s32.totalorder %s15, 1
      %p128 = por %p126, %p127
      %p129 = scmp.ne.s32.totalorder %s121, %s124
      %p130 = scmp.eq.s32.totalorder %s15, 0
      %p131 = por %p129, %p130
      %p132 = scmp.ne.s32.totalorder %s121, %s124
      %p133 = scmp.eq.s32.totalorder %s20, 1
      %p134 = por %p132, %p133
      %p135 = scmp.ne.s32.totalorder %s124, %s125
      %p136 = scmp.eq.s32.totalorder %s20, 0
      %p137 = por %p135, %p136
      %p138 = scmp.ne.s32.totalorder %s124, %s125
      %p139 = scmp.eq.s32.totalorder %s21, 1
      %p140 = por %p138, %p139
      %p142 = scmp.ne.s32.totalorder %s125, %s141
      %p143 = scmp.eq.s32.totalorder %s21, 0
      %p144 = por %p142, %p143
      %p145 = scmp.le.s32.totalorder 1, %s15
      %p146 = scmp.lt.s32.totalorder %s15, 3
      %p147 = pnand %p145, %p146
      %p148 = pneg %p147
      // Predicated region
      $region9: #{tpu_custom_call.1} parent=5 // pred_check
        _
      $region10: #{tpu_custom_call.1} parent=5 // pred_check_branch
        %150 = sbr.rel (%p147) target = $region12
      $region11: #{tpu_custom_call.1} parent=5 // pred_region
        %s151 = ssub.s32 %s15, 1
      $region12: #{tpu_custom_call.1} parent=5 // pred_fallthru
        _
      %p152 = scmp.lt.s32.totalorder %s15, 2
      // Predicated region
      $region13: #{tpu_custom_call.1} parent=5 // pred_check
        %p153 = pneg %p152
      $region14: #{tpu_custom_call.1} parent=5 // pred_check_branch
        %155 = sbr.rel (%p153) target = $region16
      $region15: #{tpu_custom_call.1} parent=5 // pred_region
        // Predicated region
        $region17: #{tpu_custom_call.1} parent=15 // pred_check
          %p156 = pneg %p49
        $region18: #{tpu_custom_call.1} parent=15 // pred_check_branch
          %158 = sbr.rel (%p156) target = $region20
        $region19: #{tpu_custom_call.1} parent=15 // pred_region
          %s159 = sadd.s32 %s22, %s23
          %s160 = smul.u32 3, %s159
          %p161 = scmp.lt.s32.totalorder %s160, 5
          %s162 = scalar_select %p161, %s160, 5
          %s163 = smul.addr %s162, 8
          %s164 = scalar_lea.vmem %s0, %s163
          %s165 = sadd.s32 %s22, %s23
          %s166 = smul.u32 3, %s165
        $region20: #{tpu_custom_call.1} parent=15 // pred_fallthru
          _
        // Predicated region
        $region21: #{tpu_custom_call.1} parent=15 // pred_check
          %p167 = pneg %p77
        $region22: #{tpu_custom_call.1} parent=15 // pred_check_branch
          %169 = sbr.rel (%p167) target = $region24
        $region23: #{tpu_custom_call.1} parent=15 // pred_region
          %s170 = sand.u32 %s67, 1
          %s171 = scalar_lea.sflag [#allocation4], %s170
          %s172 = sand.u32 %s67, 1
          %s173 = smul.addr %s172, 24
          %s174 = scalar_lea.vmem [#allocation3], %s173
          %s175 = sadd.s32 %s22, %s23
          %s176 = smul.u32 3, %s175
          %s178 = ssub.s32 384, 384
          %179 = vsyncadd %s171, %s178
          %s180 = smul.addr %s176, 128
          %s181 = scalar_lea.hbm %s1, %s180
          %s182 = sshll.u32 %s174, 4
          %s183 = int_to_ptr.vmem [resolvable:$true] %s182
          %188 = dma.hbm_to_vmem [thread:$0]  %s181, 384, %s183, %s171, 128, 128, 8
        $region24: #{tpu_custom_call.1} parent=15 // pred_fallthru
          _
        // Predicated region
        $region25: #{tpu_custom_call.1} parent=15 // pred_check
          %p189 = pneg %p105
        $region26: #{tpu_custom_call.1} parent=15 // pred_check_branch
          %191 = sbr.rel (%p189) target = $region28
        $region27: #{tpu_custom_call.1} parent=15 // pred_region
          %s192 = sadd.s32 %s22, %s23
          %s193 = smul.u32 3, %s192
          %p194 = scmp.lt.s32.totalorder %s193, 5
          %s195 = scalar_select %p194, %s193, 5
          %s196 = smul.addr %s195, 8
          %s197 = scalar_lea.vmem %s2, %s196
          %s198 = sadd.s32 %s22, %s23
          %s199 = smul.u32 3, %s198
        $region28: #{tpu_custom_call.1} parent=15 // pred_fallthru
          _
      $region16: #{tpu_custom_call.1} parent=5 // pred_fallthru
        _
      %p200 = scmp.le.s32.totalorder 1, %s15
      %p201 = scmp.lt.s32.totalorder %s15, 3
      %p202 = pnand %p200, %p201
      %p203 = pneg %p202
      // Predicated region
      $region29: #{tpu_custom_call.1} parent=5 // pred_check
        _
      $region30: #{tpu_custom_call.1} parent=5 // pred_check_branch
        %205 = sbr.rel (%p202) target = $region32
      $region31: #{tpu_custom_call.1} parent=5 // pred_region
        %s206 = ssub.s32 %s15, 1
        %s207 = sand.u32 %s70, 1
        %s208 = scalar_lea.sflag [#allocation4], %s207
        %s209 = sand.u32 %s70, 1
        %s210 = smul.addr %s209, 24
        %s211 = scalar_lea.vmem [#allocation3], %s210
        // Predicated region
        $region33: #{tpu_custom_call.1} parent=31 // pred_check
          %p212 = pneg %p83
        $region34: #{tpu_custom_call.1} parent=31 // pred_check_branch
          %214 = sbr.rel (%p212) target = $region36
        $region35: #{tpu_custom_call.1} parent=31 // pred_region
          %215 = dma.done %s208, 384
        $region36: #{tpu_custom_call.1} parent=31 // pred_fallthru
          _
        %s216 = sadd.s32 %s24, %s25
        %s217 = smul.u32 3, %s216
        %p218 = scmp.lt.s32.totalorder %s217, 5
        %s219 = scalar_select %p218, %s217, 5
        %s220 = smul.addr %s219, 8
        %s221 = scalar_lea.vmem %s0, %s220
        %p222 = pneg %p55
        %p223 = pneg %p52
        %s224 = sand.u32 %s70, 1
        %s225 = scalar_lea.sflag [#allocation4], %s224
        %s226 = sand.u32 %s70, 1
        %s227 = smul.addr %s226, 24
        %s228 = scalar_lea.vmem [#allocation3], %s227
        %p229 = pneg %p83
        %p230 = pneg %p80
        %s231 = sadd.s32 %s24, %s25
        %s232 = smul.u32 3, %s231
        %p233 = scmp.lt.s32.totalorder %s232, 5
        %s234 = scalar_select %p233, %s232, 5
        %s235 = smul.addr %s234, 8
        %s236 = scalar_lea.vmem %s2, %s235
        %p237 = pneg %p111
        %p238 = pneg %p108
        %p239 = pneg %p137
        %p240 = pneg %p134
        %s241 = sand.u32 %s124, 1
        %s242 = scalar_lea.sflag [#allocation5], %s241
        %s243 = sand.u32 %s124, 1
        %s244 = smul.addr %s243, 8
        %s245 = scalar_lea.vmem [#allocation6], %s244
        %s246 = sadd.s32 %s24, %s25
        %s247 = smul.u32 3, %s246
        %p248 = scmp.lt.s32.totalorder %s247, 5
        %s249 = scalar_select %p248, %s247, 5
        %s250 = smul.addr %s249, 8
        %s251 = scalar_lea.vmem %s0, %s250
        %s252 = sadd.s32 %s24, %s25
        %s253 = smul.u32 3, %s252
        %s254 = sadd.s32 %s24, %s25
        %s255 = smul.u32 3, %s254
        %s256 = sadd.s32 %s24, %s25
        %s257 = smul.u32 3, %s256
        %p258 = scmp.lt.s32.totalorder %s257, 5
        %s259 = scalar_select %p258, %s257, 5
        %s260 = smul.addr %s259, 8
        %s261 = scalar_lea.vmem %s2, %s260
        %s262 = sadd.s32 %s24, %s25
        %s263 = smul.u32 3, %s262
        %p264 = scmp.eq.s32.totalorder %s25, 0
        // Predicated region
        $region37: #{tpu_custom_call.1} parent=31 // pred_check
          %p265 = pneg %p264
        $region38: #{tpu_custom_call.1} parent=31 // pred_check_branch
          %267 = sbr.rel (%p265) target = $region40
        $region39: #{tpu_custom_call.1} parent=31 // pred_region
          %vm268 = vcmask 7168
          %269 = vst.msk [vmem:[#allocation2] sm:$0xff] %vm268, 0.0
          %270 = vst.msk [vmem:[#allocation2 + $0x8] sm:$0xff] %vm268, 0.0
          %271 = vst.msk [vmem:[#allocation2 + $0x10] sm:$0xff] %vm268, 0.0
        $region40: #{tpu_custom_call.1} parent=31 // pred_fallthru
          _
        %v272 = vld [vmem:[%s251] sm:$0xff]
        %v273 = vld [vmem:[%s251 + $0x8] sm:$0xff]
        %v274 = vld [vmem:[%s251 + $0x10] sm:$0xff]
        %v275 = vld [vmem:[%s211] sm:$0xff]
        %v276 = vld [vmem:[%s211 + $0x8] sm:$0xff]
        %v277 = vld [vmem:[%s211 + $0x10] sm:$0xff]
        %v278 = vmul.f32 %v272, %v275
        %v279 = vmul.f32 %v273, %v276
        %v280 = vmul.f32 %v274, %v277
        %281 = vadd.xlane.f32.xlu0 %v278
        %v282 = vpop.xlane.xlu0 %281
        %283 = vadd.xlane.f32.xlu0 %v279
        %v284 = vpop.xlane.xlu0 %283
        %285 = vadd.xlane.f32.xlu0 %v280
        %v286 = vpop.xlane.xlu0 %285
        %v287 = vld [vmem:[%s261] sm:$0xff]
        %v288 = vld [vmem:[%s261 + $0x8] sm:$0xff]
        %v289 = vld [vmem:[%s261 + $0x10] sm:$0xff]
        %v290 = vmul.f32 %v287, %v282
        %v291 = vmul.f32 %v288, %v284
        %v292 = vmul.f32 %v289, %v286
        %v293 = vmin.f32 %v290, 0.0
        %v294 = vmin.f32 %v291, 0.0
        %v295 = vmin.f32 %v292, 0.0
        %v296 = vand.u32 2147483647, %v290
        %v297 = vand.u32 2147483647, %v291
        %v298 = vand.u32 2147483647, %v292
        %v299 = vsub.f32 0.0, %v296
        %v300 = vsub.f32 0.0, %v297
        %v301 = vsub.f32 0.0, %v298
        %v302 = vmul.f32 %v299, 1.442695
        %v303 = vpow.pop %v302
        %v304 = vmul.f32 %v300, 1.442695
        %v305 = vpow.pop %v304
        %v306 = vmul.f32 %v301, 1.442695
        %v307 = vpow.pop %v306
        %v308 = vadd.f32 %v303, 1.0
        %v309 = vlog2.pop %v308
        %v310 = vmul.f32 %v309, 0.6931472
        %v311 = vmul.f32 -0.5, %v303
        %v312 = vadd.f32 %v311, 1.0
        %v313 = vmul.f32 %v312, %v303
        %v314 = vand.u32 2147483647, %v303
        %vm315 = vcmp.lt.f32.partialorder %v314, 0.0004427343
        %v316 = vsel %vm315, %v313, %v310
        %v317 = vadd.f32 %v305, 1.0
        %v318 = vlog2.pop %v317
        %v319 = vmul.f32 %v318, 0.6931472
        %v320 = vmul.f32 -0.5, %v305
        %v321 = vadd.f32 %v320, 1.0
        %v322 = vmul.f32 %v321, %v305
        %v323 = vand.u32 2147483647, %v305
        %vm324 = vcmp.lt.f32.partialorder %v323, 0.0004427343
        %v325 = vsel %vm324, %v322, %v319
        %v326 = vadd.f32 %v307, 1.0
        %v327 = vlog2.pop %v326
        %v328 = vmul.f32 %v327, 0.6931472
        %v329 = vmul.f32 -0.5, %v307
        %v330 = vadd.f32 %v329, 1.0
        %v331 = vmul.f32 %v330, %v307
        %v332 = vand.u32 2147483647, %v307
        %vm333 = vcmp.lt.f32.partialorder %v332, 0.0004427343
        %v334 = vsel %vm333, %v331, %v328
        %v335 = vsub.f32 %v293, %v316
        %v336 = vsub.f32 %v294, %v325
        %v337 = vsub.f32 %v295, %v334
        %s338 = sadd.s32 %s24, %s25
        %s339 = smul.u32 %s338, 24
        %v340 = vlaneseq
        %v341 = vshrl.u32 %v340, 7
        %v342 = vadd.s32 %v341, 8
        %v343 = vadd.s32 %v341, 16
        %v344 = vstv %s339
        %v345 = vadd.s32 %v344, %v341
        %v346 = vadd.s32 %v344, %v342
        %v347 = vadd.s32 %v344, %v343
        %v348 = vld [vmem:[#allocation2] sm:$0xff]
        %v349 = vld [vmem:[#allocation2 + $0x8] sm:$0xff]
        %v350 = vld [vmem:[#allocation2 + $0x10] sm:$0xff]
        %vm351 = vcmp.lt.s32.totalorder %v345, 40
        %vm352 = vcmp.lt.s32.totalorder %v346, 40
        %vm353 = vcmp.lt.s32.totalorder %v347, 40
        %v354 = vsel %vm351, %v335, 0.0
        %v355 = vsel %vm352, %v336, 0.0
        %v356 = vsel %vm353, %v337, 0.0
        %v357 = vadd.f32 %v348, %v354
        %v358 = vadd.f32 %v349, %v355
        %v359 = vadd.f32 %v350, %v356
        %vm360 = vcmask 7168
        %361 = vst.msk [vmem:[#allocation2] sm:$0xff] %vm360, %v357
        %362 = vst.msk [vmem:[#allocation2 + $0x8] sm:$0xff] %vm360, %v358
        %363 = vst.msk [vmem:[#allocation2 + $0x10] sm:$0xff] %vm360, %v359
        // Predicated region
        $region41: #{tpu_custom_call.1} parent=31 // pred_check
          %p364 = pneg %p264
        $region42: #{tpu_custom_call.1} parent=31 // pred_check_branch
          %366 = sbr.rel (%p364) target = $region44
        $region43: #{tpu_custom_call.1} parent=31 // pred_region
          %v367 = vld [vmem:[#allocation2] sm:$0xff]
          %v368 = vld [vmem:[#allocation2 + $0x8] sm:$0xff]
          %v369 = vld [vmem:[#allocation2 + $0x10] sm:$0xff]
          %v370 = vsel %vm360, %v367, 0.0
          %v371 = vsel %vm360, %v368, 0.0
          %v372 = vadd.f32 %v370, %v371
          %v373 = vsel %vm360, %v369, 0.0
          %v374 = vadd.f32 %v372, %v373
          %375 = vadd.xlane.f32.xlu0 %v374
          %v376 = vpop.xlane.xlu0 %375
          %v377 = vrot.slane %v376, 4
          %v378 = vadd.f32 %v376, %v377
          %v379 = vrot.slane %v378, 2
          %v380 = vadd.f32 %v378, %v379
          %v381 = vrot.slane %v380, 1
          %v382 = vadd.f32 %v380, %v381
          %s383 = vtos %v382
          %s384 = smul.f32 %s383, -0.025
          %v385 = vstv %s384
          %386 = vst [vmem:[%s245] sm:$0xff] %v385
        $region44: #{tpu_custom_call.1} parent=31 // pred_fallthru
          _
        %s387 = sand.u32 %s124, 1
        %s388 = scalar_lea.sflag [#allocation5], %s387
        %s389 = sand.u32 %s124, 1
        %s390 = smul.addr %s389, 8
        %s391 = scalar_lea.vmem [#allocation6], %s390
        // Predicated region
        $region45: #{tpu_custom_call.1} parent=31 // pred_check
          %p392 = pneg %p134
        $region46: #{tpu_custom_call.1} parent=31 // pred_check_branch
          %394 = sbr.rel (%p392) target = $region48
        $region47: #{tpu_custom_call.1} parent=31 // pred_region
          %s396 = ssub.s32 128, 128
          %397 = vsyncadd %s388, %s396
          %s398 = smul.addr %s24, 128
          %s399 = scalar_lea.hbm %s3, %s398
          %s401 = sshll.u32 %s391, 4
          %s402 = int_to_ptr.vmem [resolvable:$true] %s401
          %404 = dma.vmem_to_hbm [thread:$0]  %s402, 128, %s399, %s388
        $region48: #{tpu_custom_call.1} parent=31 // pred_fallthru
          _
      $region32: #{tpu_custom_call.1} parent=5 // pred_fallthru
        _
      %p405 = scmp.le.s32.totalorder 2, %s15
      // Predicated region
      $region49: #{tpu_custom_call.1} parent=5 // pred_check
        %p406 = pneg %p405
      $region50: #{tpu_custom_call.1} parent=5 // pred_check_branch
        %408 = sbr.rel (%p406) target = $region52
      $region51: #{tpu_custom_call.1} parent=5 // pred_region
        %s409 = ssub.s32 %s15, 2
        // Predicated region
        $region53: #{tpu_custom_call.1} parent=51 // pred_check
          %p410 = pneg %p140
        $region54: #{tpu_custom_call.1} parent=51 // pred_check_branch
          %412 = sbr.rel (%p410) target = $region56
        $region55: #{tpu_custom_call.1} parent=51 // pred_region
          %s413 = sand.u32 %s125, 1
          %s414 = scalar_lea.sflag [#allocation5], %s413
          %s415 = sand.u32 %s125, 1
          %s416 = smul.addr %s415, 8
          %s417 = scalar_lea.vmem [#allocation6], %s416
          %418 = dma.done %s414, 128
        $region56: #{tpu_custom_call.1} parent=51 // pred_fallthru
          _
      $region52: #{tpu_custom_call.1} parent=5 // pred_fallthru
        _
    $region6: #{tpu_custom_call.1} parent=1 // loop_footer
      %s19 = sadd.s32 1, %s15
    $region7: #{tpu_custom_call.1} parent=1 // loop_footer_branch
      %14 = sbr.rel target = $region3
    $region8: #{tpu_custom_call.1} parent=1 // loop_exit
      _
    %419 = vsyncpa [#allocation4], 1
    %s420 = scalar_lea.sflag [#allocation4], 1
    %421 = vsyncpa %s420, 1
    %422 = vsyncpa [#allocation5], 1
    %s423 = scalar_lea.sflag [#allocation5], 1
    %424 = vsyncpa %s423, 1

</llo_original>
